<compile_context>
chip_gen: v6e
topology: v6e:2x2x1
jax: 0.10.0
libtpu: 0.0.40
codegen_flags: <defaults>
</compile_context>

<pallas_src>
import jax
import jax.numpy as jnp
from jax import lax
from jax.experimental import pallas as pl
from jax.experimental.pallas import tpu as pltpu


def nc_net_kernel(x_ref, w_ref, o_ref):
    # x_ref: (M, K), w_ref: (N, K), o_ref: (M, N)
    # y = x @ W^T: contract K (axis 1) of both operands directly on the MXU,
    # accumulating in f32.
    o_ref[...] = lax.dot_general(
        x_ref[...],
        w_ref[...],
        dimension_numbers=(((1,), (1,)), ((), ())),
        preferred_element_type=jnp.float32,
    ).astype(o_ref.dtype)


def nc_net_forward(x, w):
    """Pallas equivalent of NC_Net.forward: recurrent_kernel(data) = x @ W^T."""
    M, K = x.shape
    N, K2 = w.shape
    assert K == K2, "n_input mismatch"
    return pl.pallas_call(
        nc_net_kernel,
        out_shape=jax.ShapeDtypeStruct((M, N), x.dtype),
        # No grid: the whole problem lives in VMEM; Pallas DMAs each array
        # once, no per-step pipeline overhead.
        in_specs=[
            pl.BlockSpec(memory_space=pltpu.MemorySpace.VMEM),
            pl.BlockSpec(memory_space=pltpu.MemorySpace.VMEM),
        ],
        out_specs=pl.BlockSpec(memory_space=pltpu.MemorySpace.VMEM),
    )(x, w)


if __name__ == "__main__":
    key = jax.random.PRNGKey(0)
    k_x, k_w = jax.random.split(key)

    # Small shapes consistent with the module: n_input=32, n_output=16, batch=8
    n_input, n_output, batch = 32, 16, 8

    x = jax.random.normal(k_x, (batch, n_input), dtype=jnp.float32)

    # Deterministic init mimicking nn.Linear default (uniform in +-1/sqrt(n_input))
    bound = 1.0 / (n_input ** 0.5)
    w = jax.random.uniform(
        k_w, (n_output, n_input), dtype=jnp.float32, minval=-bound, maxval=bound
    )

    y = nc_net_forward(x, w)
    jax.block_until_ready(y)

    # Reference check (plain JAX)
    y_ref = x @ w.T
    assert y.shape == (batch, n_output)
    assert jnp.allclose(y, y_ref, atol=1e-5, rtol=1e-5)

    print("KERNEL_OK")
</pallas_src>

<mosaic_0001>
module attributes {stable_mosaic.version = 11 : i64} {
  func.func @nc_net_kernel(%arg0: memref<8x32xf32, #tpu.memory_space<vmem>>, %arg1: memref<16x32xf32, #tpu.memory_space<vmem>>, %arg2: memref<8x16xf32, #tpu.memory_space<vmem>>) attributes {dimension_semantics = [], scalar_prefetch = 0 : i64, scratch_operands = 0 : i64, tpu.core_type = #tpu.core_type<tc>} {
    %c0 = arith.constant 0 : index
    %c0_0 = arith.constant 0 : index
    %0 = vector.load %arg0[%c0, %c0_0] : memref<8x32xf32, #tpu.memory_space<vmem>>, vector<8x32xf32>
    %c0_1 = arith.constant 0 : index
    %c0_2 = arith.constant 0 : index
    %1 = vector.load %arg1[%c0_1, %c0_2] : memref<16x32xf32, #tpu.memory_space<vmem>>, vector<16x32xf32>
    %cst = arith.constant dense<0.000000e+00> : vector<8x16xf32>
    %2 = tpu.matmul %0, %1, %cst {dimension_numbers = #tpu.dot_dimension_numbers<[1], [1], [0], [0], [0, 0, 1, 0], [], []>} : vector<8x32xf32>, vector<16x32xf32>, vector<8x16xf32> -> vector<8x16xf32>
    %c0_3 = arith.constant 0 : index
    %c0_4 = arith.constant 0 : index
    %3 = vector.load %arg2[%c0_3, %c0_4] : memref<8x16xf32, #tpu.memory_space<vmem>>, vector<8x16xf32>
    tpu.vector_store %arg2[%c0_3, %c0_4], %2 {strides = array<i32>} : memref<8x16xf32, #tpu.memory_space<vmem>>, vector<8x16xf32>,
    return
  }
}

</mosaic_0001>

<llo_original>
// kernel: tpu_custom_call.1
$region0: #{tpu_custom_call.1}
  #allocation0 [shape = 'u32[]', space=smem, size = 0x4, offset = 0x4, fixed_abs, tag = 'smem constant byte address 0x4 - core index']
  #allocation1 [shape = 'u32[144,128]{1,0:T(1,128)}', space=vmem, size = 0x12000, scoped, tag = 'internal scratch']
  %s0 = inlined_call_operand.hbm [shape: f32[8,32], index: 0, kind: input, shape index: {}]
  %s1 = inlined_call_operand.hbm [shape: f32[16,32], index: 1, kind: input, shape index: {}]
  %s2 = inlined_call_operand.hbm [shape: f32[8,16], index: 2, kind: output, shape index: {}]
  %s3 = sld [smem:[#allocation0]]
  $region26: #{tpu_custom_call.1} parent=0
    _
  %s5 = ssub.s32 1, %s3
  %s6 = scalar_select 0, %s5, %s3
  $region1: #{tpu_custom_call.1} parent=0
    #allocation2 [shape = 'u8[4096]{0}', space=vmem, size = 0x1000, scoped, tag = 'input window, operand 0, single buffered']
    #allocation3 [shape = 's32[1]{0}', space=sflag, size = 0x4, scoped, tag = 'scoped memory for tpu_custom_call.1']
    #allocation4 [shape = 's32[1]{0}', space=sflag, size = 0x4, scoped, tag = 'scoped memory for tpu_custom_call.1']
    #allocation5 [shape = 'u8[8192]{0}', space=vmem, size = 0x2000, scoped, tag = 'input window, operand 1, single buffered']
    #allocation6 [shape = 's32[1]{0}', space=sflag, size = 0x4, scoped, tag = 'scoped memory for tpu_custom_call.1']
    #allocation7 [shape = 'u8[4096]{0}', space=vmem, size = 0x1000, scoped, tag = 'output window, operand 0, single buffered']
    %7 = vsyncpa [#allocation3], 0
    %8 = vsyncpa [#allocation6], 0
    %9 = vsyncpa [#allocation4], 0
    // Predicated region
    $region2: #{tpu_custom_call.1} parent=1 // pred_check
      _
    $region3: #{tpu_custom_call.1} parent=1 // pred_check_branch
      %11 = sbr.rel (0) target = $region5
    $region4: #{tpu_custom_call.1} parent=1 // pred_region
      %s13 = ssub.s32 128, 128
      %14 = vsyncadd [#allocation3], %s13
      %s16 = sshll.u32 [#allocation2], 4
      %s17 = int_to_ptr.vmem [resolvable:$true] %s16
      %19 = dma.hbm_to_vmem [thread:$0]  %s0, 128, %s17, [#allocation3]
    $region5: #{tpu_custom_call.1} parent=1 // pred_fallthru
      _
    // Predicated region
    $region6: #{tpu_custom_call.1} parent=1 // pred_check
      _
    $region7: #{tpu_custom_call.1} parent=1 // pred_check_branch
      %21 = sbr.rel (0) target = $region9
    $region8: #{tpu_custom_call.1} parent=1 // pred_region
      %s23 = ssub.s32 256, 256
      %24 = vsyncadd [#allocation6], %s23
      %s25 = sshll.u32 [#allocation5], 4
      %s26 = int_to_ptr.vmem [resolvable:$true] %s25
      %31 = dma.hbm_to_vmem [thread:$0]  %s1, 256, %s26, [#allocation6], 128, 128, 8
    $region9: #{tpu_custom_call.1} parent=1 // pred_fallthru
      _
    // Predicated region
    $region10: #{tpu_custom_call.1} parent=1 // pred_check
      _
    $region11: #{tpu_custom_call.1} parent=1 // pred_check_branch
      %33 = sbr.rel (0) target = $region13
    $region12: #{tpu_custom_call.1} parent=1 // pred_region
      %34 = dma.done [#allocation3], 128
    $region13: #{tpu_custom_call.1} parent=1 // pred_fallthru
      _
    // Predicated region
    $region14: #{tpu_custom_call.1} parent=1 // pred_check
      _
    $region15: #{tpu_custom_call.1} parent=1 // pred_check_branch
      %36 = sbr.rel (0) target = $region17
    $region16: #{tpu_custom_call.1} parent=1 // pred_region
      %37 = dma.done [#allocation6], 256
    $region17: #{tpu_custom_call.1} parent=1 // pred_fallthru
      _
    %v38 = vld [vmem:[#allocation2] sm:$0xff]
    %v39 = vld [vmem:[#allocation5] sm:$0xff]
    %v40 = vld [vmem:[#allocation5 + $0x8] sm:$0xff]
    %vm41 = vcmask 261120
    %v43 = vsel %vm41, %v38, 0
    %v46 = vsel %vm41, %v39, 0
    %v49 = vsel %vm41, %v40, 0
    %51 = vmatprep.subr.mxu0 0.0
    %52 = vmatpush1.xpose.msra.mxu0 0.0
    %53 = vmatprep.subr.mxu0 0.0
    %54 = vmatpush1.xpose.msra.mxu0 0.0
    %55 = vmatprep.subr.mxu0 0.0
    %56 = vmatpush1.xpose.msra.mxu0 0.0
    %57 = vmatprep.subr.mxu0 0.0
    %58 = vmatpush1.xpose.msra.mxu0 0.0
    %59 = vmatprep.subr.mxu0 0.0
    %60 = vmatpush1.xpose.msra.mxu0 0.0
    %61 = vmatprep.subr.mxu0 0.0
    %62 = vmatpush1.xpose.msra.mxu0 0.0
    %63 = vmatprep.subr.mxu0 0.0
    %64 = vmatpush1.xpose.msra.mxu0 0.0
    %65 = vmatprep.subr.mxu0 0.0
    %66 = vmatpush1.xpose.msra.mxu0 0.0
    %67 = vmatprep.subr.mxu0 0.0
    %68 = vmatpush1.xpose.msra.mxu0 0.0
    %69 = vmatprep.subr.mxu0 0.0
    %70 = vmatpush1.xpose.msra.mxu0 0.0
    %71 = vmatprep.subr.mxu0 0.0
    %72 = vmatpush1.xpose.msra.mxu0 0.0
    %73 = vmatprep.subr.mxu0 0.0
    %74 = vmatpush1.xpose.msra.mxu0 0.0
    %75 = vmatprep.subr.mxu0 0.0
    %76 = vmatpush1.xpose.msra.mxu0 0.0
    %77 = vmatprep.subr.mxu0 0.0
    %78 = vmatpush1.xpose.msra.mxu0 0.0
    %79 = vmatprep.subr.mxu0 0.0
    %80 = vmatpush1.xpose.msra.mxu0 %v49
    %81 = vmatprep.subr.mxu0 0.0
    %82 = vmatpush1.xpose.msra.mxu0 %v46
    %83 = vmatprep.subr.mxu0 0.0
    %84 = vmatpush2.xpose.msra.mxu0 0.0
    %85 = vmatprep.subr.mxu0 0.0
    %86 = vmatpush2.xpose.msra.mxu0 0.0
    %87 = vmatprep.subr.mxu0 0.0
    %88 = vmatpush2.xpose.msra.mxu0 0.0
    %89 = vmatprep.subr.mxu0 0.0
    %90 = vmatpush2.xpose.msra.mxu0 0.0
    %91 = vmatprep.subr.mxu0 0.0
    %92 = vmatpush2.xpose.msra.mxu0 0.0
    %93 = vmatprep.subr.mxu0 0.0
    %94 = vmatpush2.xpose.msra.mxu0 0.0
    %95 = vmatprep.subr.mxu0 0.0
    %96 = vmatpush2.xpose.msra.mxu0 0.0
    %97 = vmatprep.subr.mxu0 0.0
    %98 = vmatpush2.xpose.msra.mxu0 0.0
    %99 = vmatprep.subr.mxu0 0.0
    %100 = vmatpush2.xpose.msra.mxu0 0.0
    %101 = vmatprep.subr.mxu0 0.0
    %102 = vmatpush2.xpose.msra.mxu0 0.0
    %103 = vmatprep.subr.mxu0 0.0
    %104 = vmatpush2.xpose.msra.mxu0 0.0
    %105 = vmatprep.subr.mxu0 0.0
    %106 = vmatpush2.xpose.msra.mxu0 0.0
    %107 = vmatprep.subr.mxu0 0.0
    %108 = vmatpush2.xpose.msra.mxu0 0.0
    %109 = vmatprep.subr.mxu0 0.0
    %110 = vmatpush2.xpose.msra.mxu0 0.0
    %111 = vmatprep.subr.mxu0 0.0
    %112 = vmatpush2.xpose.msra.mxu0 0.0
    %113 = vmatprep.subr.mxu0 0.0
    %114 = vmatpush2.xpose.msra.mxu0 0.0
    %115 = vmatprep.mubr.f32.mxu0 0.0
    %116 = vmatmul.mubr.f32.gmra.mxu0 %v43
    %v117 = vpop.f32.mrf.mxu0
    %v118 = vadd.f32 0.0, %v117
    %v119 = vpop.f32.mrf.mxu0
    %120 = vdwg.mxu0
    %vm121 = vcmask 130048
    %122 = vst.msk [vmem:[#allocation7] sm:$0xff] %vm121, %v118
    // Predicated region
    $region18: #{tpu_custom_call.1} parent=1 // pred_check
      _
    $region19: #{tpu_custom_call.1} parent=1 // pred_check_branch
      %124 = sbr.rel (0) target = $region21
    $region20: #{tpu_custom_call.1} parent=1 // pred_region
      %s126 = ssub.s32 128, 128
      %127 = vsyncadd [#allocation4], %s126
      %s129 = sshll.u32 [#allocation7], 4
      %s130 = int_to_ptr.vmem [resolvable:$true] %s129
      %132 = dma.vmem_to_hbm [thread:$0]  %s130, 128, %s2, [#allocation4]
    $region21: #{tpu_custom_call.1} parent=1 // pred_fallthru
      _
    // Predicated region
    $region22: #{tpu_custom_call.1} parent=1 // pred_check
      _
    $region23: #{tpu_custom_call.1} parent=1 // pred_check_branch
      %134 = sbr.rel (0) target = $region25
    $region24: #{tpu_custom_call.1} parent=1 // pred_region
      %135 = dma.done [#allocation4], 128
    $region25: #{tpu_custom_call.1} parent=1 // pred_fallthru
      _
    %136 = vsyncpa [#allocation3], 1
    %137 = vsyncpa [#allocation6], 1
    %138 = vsyncpa [#allocation4], 1

</llo_original>
